<compile_context>
chip_gen: v7x
topology: tpu7x:2x2x1
jax: 0.10.0
libtpu: 0.0.40
codegen_flags: <defaults>
</compile_context>

<pallas_src>
import functools

import jax
import jax.numpy as jnp
import numpy as np
from jax import lax
from jax.experimental import pallas as pl
from jax.experimental.pallas import tpu as pltpu
from jax.scipy.special import erf as jax_erf

INV_SQRT2 = 0.7071067811865476

# Abramowitz & Stegun 7.1.26 rational erf approximation, |abs error| < 1.5e-7.
# Used in-kernel (instead of the erf primitive) so the kernel lowers on all Mosaic
# versions; intentional, tiny deviation from torch.erf / the host reference.
_ERF_P = 0.3275911
_ERF_A1 = 0.254829592
_ERF_A2 = -0.284496736
_ERF_A3 = 1.421413741
_ERF_A4 = -1.453152027
_ERF_A5 = 1.061405429


def _erf_approx(x):
    ax = jnp.abs(x)
    t = 1.0 / (1.0 + _ERF_P * ax)
    poly = ((((_ERF_A5 * t + _ERF_A4) * t + _ERF_A3) * t + _ERF_A2) * t + _ERF_A1) * t
    y = 1.0 - poly * jnp.exp(-ax * ax)
    return jnp.where(x >= 0, y, -y)


# ----------------------------------------------------------------------------------
# Kernel
# ----------------------------------------------------------------------------------
def lm_head_kernel(x_ref, dwt_ref, db_ref, g_ref, b_ref, wdec_ref, bdec_ref,
                   o_ref, t_ref, *, eps):
    """Grid = (row tiles [parallel], vocab tiles [arbitrary]).

    x_ref    : (tile_n, H)  bf16   hidden rows
    dwt_ref  : (H, H)       bf16   dense weight, already transposed (in, out)
    db_ref   : (1, H)       f32    dense bias
    g_ref    : (1, H)       f32    LayerNorm gamma
    b_ref    : (1, H)       f32    LayerNorm beta
    wdec_ref : (H, tile_v)  bf16   pre-transposed tied-embedding slab
    bdec_ref : (1, tile_v)  f32    decoder bias slab
    o_ref    : (tile_n, tile_v)    logits tile (f32 or bf16)
    t_ref    : (tile_n, H)  bf16   VMEM stash of the transformed rows
    """
    # ---- Phase 1: dense -> GELU -> LayerNorm, once per row tile (first vocab step).
    @pl.when(pl.program_id(1) == 0)
    def _():
        h = jnp.dot(x_ref[...], dwt_ref[...],
                    preferred_element_type=jnp.float32) + db_ref[...]        # (tn,H) f32
        # exact (erf-based) GELU, as in the PyTorch module.
        # TODO(synk): only the 'gelu' hidden_act is wired; 'relu'/'swish' variants omitted.
        h = h * 0.5 * (1.0 + _erf_approx(h * INV_SQRT2))
        # BertLayerNorm: biased variance over hidden axis, fused sum / sum-of-squares.
        hdim = h.shape[-1]
        s1 = jnp.sum(h, axis=-1, keepdims=True)
        s2 = jnp.sum(h * h, axis=-1, keepdims=True)
        u = s1 * (1.0 / hdim)
        var = jnp.maximum(s2 * (1.0 / hdim) - u * u, 0.0)   # clamp: no rsqrt(<0) ever
        y = g_ref[...] * ((h - u) * lax.rsqrt(var + eps)) + b_ref[...]
        t_ref[...] = y.astype(t_ref.dtype)                                   # bf16 stash

    # ---- Phase 2: plain (tn,H) @ (H,tv) MXU matmul against this vocab slab.
    logits = jnp.dot(t_ref[...], wdec_ref[...], preferred_element_type=jnp.float32)
    o_ref[...] = (logits + bdec_ref[...]).astype(o_ref.dtype)


# ----------------------------------------------------------------------------------
# Host-side helpers
# ----------------------------------------------------------------------------------
def _round_up(x, m):
    return (x + m - 1) // m * m


def _device_defaults():
    """Generation-aware tile defaults (roofline-derived, see perf review)."""
    kind = ""
    try:
        kind = jax.devices()[0].device_kind.lower()
    except Exception:
        pass
    if "v5 lite" in kind or "v5e" in kind or "v5litepod" in kind:
        # ~245 flops/byte roofline: tile_n=256 already balances the table stream.
        return dict(tile_n=256, tile_v=2048)
    if "v6" in kind or "trillium" in kind:
        # ~650 flops/byte roofline: larger row tiles cut table re-reads.
        return dict(tile_n=512, tile_v=2048)
    if "v7" in kind:
        # ~310 flops/byte roofline but only 64 MiB VMEM per TC: moderate tiles.
        return dict(tile_n=512, tile_v=1536)
    return dict(tile_n=256, tile_v=1536)


def prepare_lm_head_params(dense_w, dense_b, gamma, beta, decoder_w, decoder_b,
                           *, tile_v=None):
    """One-time parameter prep (hoisted out of the per-call path).

    Casts to bf16, transposes the tied embedding table to (H, Vp) and pads the
    vocab axis to a multiple of the vocab tile — do this once at model init so no
    ~100 MiB cast/pad XLA prologue runs on every forward call.
    """
    H = dense_w.shape[0]
    V = decoder_w.shape[0]
    if tile_v is None:
        tile_v = _device_defaults()["tile_v"]
    if V <= tile_v:
        tile_v_eff, Vp = V, V
    else:
        tile_v_eff = _round_up(int(tile_v), 128)
        Vp = _round_up(V, tile_v_eff)

    dwt = dense_w.T.astype(jnp.bfloat16)              # (H_in, H_out): kernel does x @ dwt
    db = dense_b.reshape(1, H).astype(jnp.float32)
    g = gamma.reshape(1, H).astype(jnp.float32)
    b = beta.reshape(1, H).astype(jnp.float32)
    wdec_t = decoder_w.T.astype(jnp.bfloat16)         # (H, V) pre-transposed table
    bdec = decoder_b.reshape(1, V).astype(jnp.float32)
    if Vp != V:
        wdec_t = jnp.pad(wdec_t, ((0, 0), (0, Vp - V)))
        bdec = jnp.pad(bdec, ((0, 0), (0, Vp - V)))

    return dict(dwt=dwt, db=db, gamma=g, beta=b, wdec_t=wdec_t, bdec=bdec,
                H=H, V=V, Vp=Vp, tile_v=tile_v_eff)


def bert_lm_prediction_head_apply(hidden_states, params, *, eps=1e-5, tile_n=None,
                                  out_dtype=jnp.float32, keep_vocab_padding=False,
                                  single_buffer_constants=False,
                                  vmem_limit_bytes=None):
    """hidden_states: (B, S, H) f32; params: output of prepare_lm_head_params."""
    B, S, H = hidden_states.shape
    assert H == params["H"], "hidden size mismatch vs prepared params"
    V, Vp, tile_v = params["V"], params["Vp"], params["tile_v"]
    N = B * S

    if tile_n is None:
        tile_n = _device_defaults()["tile_n"]
    tile_n = max(8, _round_up(min(int(tile_n), _round_up(N, 8)), 8))
    Np = _round_up(N, tile_n)

    x2 = hidden_states.reshape(N, H).astype(jnp.bfloat16)
    if Np != N:
        x2 = jnp.pad(x2, ((0, Np - N), (0, 0)))

    # VMEM budget from the actual (double-buffered) block sizes, with headroom.
    out_bytes = jnp.dtype(out_dtype).itemsize
    if vmem_limit_bytes is None:
        est = (2 * tile_n * H * 2            # x blocks, bf16, double-buffered
               + 2 * H * H * 2               # dense weight
               + 2 * H * tile_v * 2          # decoder table slab
               + 2 * tile_n * tile_v * out_bytes  # output tile
               + tile_n * H * 2              # bf16 scratch stash
               + 2 * (3 * H + tile_v) * 4)   # small bias / gamma / beta vectors
        vmem_limit_bytes = max(32 << 20, min(128 << 20, int(est * 1.4) + (4 << 20)))

    # Grid-constant operands never change block index; optionally single-buffer them
    # (useful under v7x's 64 MiB VMEM cap once tiles are enlarged).
    const_kw = dict(pipeline_mode=pl.Buffered(1)) if single_buffer_constants else {}

    grid = (Np // tile_n, Vp // tile_v)
    out = pl.pallas_call(
        functools.partial(lm_head_kernel, eps=eps),
        out_shape=jax.ShapeDtypeStruct((Np, Vp), out_dtype),
        grid=grid,
        in_specs=[
            pl.BlockSpec((tile_n, H), lambda i, j: (i, 0)),               # hidden rows
            pl.BlockSpec((H, H), lambda i, j: (0, 0), **const_kw),        # dense W^T
            pl.BlockSpec((1, H), lambda i, j: (0, 0), **const_kw),        # dense bias
            pl.BlockSpec((1, H), lambda i, j: (0, 0), **const_kw),        # LN gamma
            pl.BlockSpec((1, H), lambda i, j: (0, 0), **const_kw),        # LN beta
            pl.BlockSpec((H, tile_v), lambda i, j: (0, j)),               # table slab
            pl.BlockSpec((1, tile_v), lambda i, j: (0, j)),               # decoder bias
        ],
        out_specs=pl.BlockSpec((tile_n, tile_v), lambda i, j: (i, j)),
        scratch_shapes=[pltpu.VMEM((tile_n, H), jnp.bfloat16)],           # transformed rows
        compiler_params=pltpu.CompilerParams(
            dimension_semantics=("parallel", "arbitrary"),
            vmem_limit_bytes=vmem_limit_bytes),
    )(x2, params["dwt"], params["db"], params["gamma"], params["beta"],
      params["wdec_t"], params["bdec"])

    # Only slice when padding actually happened (avoids a second full logits copy).
    if Np != N:
        out = out[:N]
    if Vp != V and not keep_vocab_padding:
        out = out[:, :V]
    v_out = Vp if (keep_vocab_padding and Vp != V) else V
    return out.reshape(B, S, v_out)


def bert_lm_prediction_head(hidden_states, dense_w, dense_b, gamma, beta,
                            decoder_w, decoder_b, *, eps=1e-5, tile_n=None,
                            tile_v=None, out_dtype=jnp.float32):
    """One-shot convenience wrapper (for repeated calls, prepare params once)."""
    params = prepare_lm_head_params(dense_w, dense_b, gamma, beta,
                                    decoder_w, decoder_b, tile_v=tile_v)
    return bert_lm_prediction_head_apply(hidden_states, params, eps=eps,
                                         tile_n=tile_n, out_dtype=out_dtype)


# ----------------------------------------------------------------------------------
# Self-test
# ----------------------------------------------------------------------------------
if __name__ == "__main__":
    key = jax.random.PRNGKey(0)
    # Small BERT-like config: batch=2, seq=8, hidden=32, vocab=256.
    B, S, H, V = 2, 8, 32, 256

    k = jax.random.split(key, 7)
    hidden = jax.random.normal(k[0], (B, S, H), jnp.float32)
    dense_w = 0.02 * jax.random.normal(k[1], (H, H), jnp.float32)    # PyTorch (out, in)
    dense_b = 0.02 * jax.random.normal(k[2], (H,), jnp.float32)
    gamma = jnp.ones((H,), jnp.float32) + 0.1 * jax.random.normal(k[3], (H,), jnp.float32)
    beta = 0.1 * jax.random.normal(k[4], (H,), jnp.float32)
    emb_w = 0.02 * jax.random.normal(k[5], (V, H), jnp.float32)      # tied embedding weights
    # Module inits decoder bias to zeros; perturb deterministically to exercise the add.
    dec_b = 0.02 * jax.random.normal(k[6], (V,), jnp.float32)

    # Prepare once (hoisted table cast / transpose / pad), then apply.  Small tiles
    # here so both grid axes actually iterate (2 row tiles x 2 vocab tiles).
    params = prepare_lm_head_params(dense_w, dense_b, gamma, beta, emb_w, dec_b,
                                    tile_v=128)
    out = bert_lm_prediction_head_apply(hidden, params, tile_n=8,
                                        out_dtype=jnp.float32)
    out = jax.block_until_ready(out)

    # Pure-JAX reference mirroring the PyTorch forward (bf16 MXU operands / f32 accum,
    # true erf-based GELU, eval-mode — the head has no dropout).
    xb = hidden.reshape(B * S, H).astype(jnp.bfloat16)
    h = jnp.dot(xb, dense_w.T.astype(jnp.bfloat16),
                preferred_element_type=jnp.float32) + dense_b
    h = h * 0.5 * (1.0 + jax_erf(h * INV_SQRT2))
    u = h.mean(-1, keepdims=True)
    s = ((h - u) ** 2).mean(-1, keepdims=True)
    t = gamma * ((h - u) / jnp.sqrt(s + 1e-5)) + beta
    ref = jnp.dot(t.astype(jnp.bfloat16), emb_w.astype(jnp.bfloat16).T,
                  preferred_element_type=jnp.float32) + dec_b
    ref = np.asarray(ref.reshape(B, S, V))

    np.testing.assert_allclose(np.asarray(out), ref, atol=1e-3, rtol=1e-3)

    # Also exercise the bf16-logits fast path (halves the dominant HBM write stream).
    out_bf16 = bert_lm_prediction_head_apply(hidden, params, tile_n=8,
                                             out_dtype=jnp.bfloat16)
    out_bf16 = jax.block_until_ready(out_bf16)
    np.testing.assert_allclose(np.asarray(out_bf16, dtype=np.float32), ref,
                               atol=2e-2, rtol=2e-2)

    print("KERNEL_OK")
</pallas_src>

<mosaic_0001>
module attributes {stable_mosaic.version = 11 : i64} {
  func.func @lm_head_kernel(%arg0: i32, %arg1: i32, %arg2: memref<8x32xbf16, #tpu.memory_space<vmem>>, %arg3: memref<32x32xbf16, #tpu.memory_space<vmem>>, %arg4: memref<1x32xf32, #tpu.memory_space<vmem>>, %arg5: memref<1x32xf32, #tpu.memory_space<vmem>>, %arg6: memref<1x32xf32, #tpu.memory_space<vmem>>, %arg7: memref<32x128xbf16, #tpu.memory_space<vmem>>, %arg8: memref<1x128xf32, #tpu.memory_space<vmem>>, %arg9: memref<8x128xf32, #tpu.memory_space<vmem>>, %arg10: memref<8x32xbf16, #tpu.memory_space<vmem>>) attributes {dimension_semantics = [#tpu.dimension_semantics<parallel>, #tpu.dimension_semantics<arbitrary>], iteration_bounds = array<i64: 2, 2>, scalar_prefetch = 0 : i64, scratch_operands = 1 : i64, tpu.core_type = #tpu.core_type<tc>, window_params = [{transform_indices = @transform_0, window_bounds = array<i64: 8, 32>}, {pipeline_mode = #tpu.pipeline_mode<synchronous>, transform_indices = @transform_1, window_bounds = array<i64: 32, 32>}, {pipeline_mode = #tpu.pipeline_mode<synchronous>, transform_indices = @transform_2, window_bounds = array<i64: 1, 32>}, {pipeline_mode = #tpu.pipeline_mode<synchronous>, transform_indices = @transform_3, window_bounds = array<i64: 1, 32>}, {pipeline_mode = #tpu.pipeline_mode<synchronous>, transform_indices = @transform_4, window_bounds = array<i64: 1, 32>}, {transform_indices = @transform_5, window_bounds = array<i64: 32, 128>}, {transform_indices = @transform_6, window_bounds = array<i64: 1, 128>}, {transform_indices = @transform_7, window_bounds = array<i64: 8, 128>}]} {
    %c0_i32 = arith.constant 0 : i32
    %0 = arith.cmpi eq, %arg1, %c0_i32 : i32
    %1 = arith.extui %0 : i1 to i32
    %c0_i32_0 = arith.constant 0 : i32
    %2 = arith.cmpi ne, %1, %c0_i32_0 : i32
    scf.if %2 {
      %c0_8 = arith.constant 0 : index
      %c0_9 = arith.constant 0 : index
      %10 = vector.load %arg2[%c0_8, %c0_9] : memref<8x32xbf16, #tpu.memory_space<vmem>>, vector<8x32xbf16>
      %c0_10 = arith.constant 0 : index
      %c0_11 = arith.constant 0 : index
      %11 = vector.load %arg3[%c0_10, %c0_11] : memref<32x32xbf16, #tpu.memory_space<vmem>>, vector<32x32xbf16>
      %cst_12 = arith.constant dense<0.000000e+00> : vector<8x32xf32>
      %12 = tpu.matmul %10, %11, %cst_12 {dimension_numbers = #tpu.dot_dimension_numbers<[1], [0], [0], [1], [0, 0, 1, 1], [], []>} : vector<8x32xbf16>, vector<32x32xbf16>, vector<8x32xf32> -> vector<8x32xf32>
      %c0_13 = arith.constant 0 : index
      %c0_14 = arith.constant 0 : index
      %13 = vector.load %arg4[%c0_13, %c0_14] : memref<1x32xf32, #tpu.memory_space<vmem>>, vector<1x32xf32>
      %14 = vector.broadcast %13 : vector<1x32xf32> to vector<8x32xf32>
      %15 = arith.addf %12, %14 : vector<8x32xf32>
      %cst_15 = arith.constant 5.000000e-01 : f32
      %16 = vector.broadcast %cst_15 : f32 to vector<8x32xf32>
      %17 = arith.mulf %15, %16 : vector<8x32xf32>
      %cst_16 = arith.constant 0.707106769 : f32
      %18 = vector.broadcast %cst_16 : f32 to vector<8x32xf32>
      %19 = arith.mulf %15, %18 : vector<8x32xf32>
      %20 = math.absf %19 : vector<8x32xf32>
      %cst_17 = arith.constant 0.327591091 : f32
      %21 = vector.broadcast %cst_17 : f32 to vector<8x32xf32>
      %22 = arith.mulf %21, %20 : vector<8x32xf32>
      %cst_18 = arith.constant 1.000000e+00 : f32
      %23 = vector.broadcast %cst_18 : f32 to vector<8x32xf32>
      %24 = arith.addf %23, %22 : vector<8x32xf32>
      %cst_19 = arith.constant 1.000000e+00 : f32
      %25 = vector.broadcast %cst_19 : f32 to vector<8x32xf32>
      %26 = arith.divf %25, %24 : vector<8x32xf32>
      %cst_20 = arith.constant 1.06140542 : f32
      %27 = vector.broadcast %cst_20 : f32 to vector<8x32xf32>
      %28 = arith.mulf %27, %26 : vector<8x32xf32>
      %cst_21 = arith.constant -1.45315206 : f32
      %29 = vector.broadcast %cst_21 : f32 to vector<8x32xf32>
      %30 = arith.addf %28, %29 : vector<8x32xf32>
      %31 = arith.mulf %30, %26 : vector<8x32xf32>
      %cst_22 = arith.constant 1.42141378 : f32
      %32 = vector.broadcast %cst_22 : f32 to vector<8x32xf32>
      %33 = arith.addf %31, %32 : vector<8x32xf32>
      %34 = arith.mulf %33, %26 : vector<8x32xf32>
      %cst_23 = arith.constant -0.284496725 : f32
      %35 = vector.broadcast %cst_23 : f32 to vector<8x32xf32>
      %36 = arith.addf %34, %35 : vector<8x32xf32>
      %37 = arith.mulf %36, %26 : vector<8x32xf32>
      %cst_24 = arith.constant 0.254829586 : f32
      %38 = vector.broadcast %cst_24 : f32 to vector<8x32xf32>
      %39 = arith.addf %37, %38 : vector<8x32xf32>
      %40 = arith.mulf %39, %26 : vector<8x32xf32>
      %cst_25 = arith.constant 0.000000e+00 : f32
      %41 = vector.broadcast %cst_25 : f32 to vector<8x32xf32>
      %42 = arith.subf %41, %20 : vector<8x32xf32>
      %43 = arith.mulf %42, %20 : vector<8x32xf32>
      %44 = math.exp %43 : vector<8x32xf32>
      %45 = arith.mulf %40, %44 : vector<8x32xf32>
      %cst_26 = arith.constant 1.000000e+00 : f32
      %46 = vector.broadcast %cst_26 : f32 to vector<8x32xf32>
      %47 = arith.subf %46, %45 : vector<8x32xf32>
      %cst_27 = arith.constant 0.000000e+00 : f32
      %48 = vector.broadcast %cst_27 : f32 to vector<8x32xf32>
      %49 = arith.cmpf oge, %19, %48 : vector<8x32xf32>
      %cst_28 = arith.constant 0.000000e+00 : f32
      %50 = vector.broadcast %cst_28 : f32 to vector<8x32xf32>
      %51 = arith.subf %50, %47 : vector<8x32xf32>
      %52 = arith.select %49, %47, %51 : vector<8x32xi1>, vector<8x32xf32>
      %cst_29 = arith.constant 1.000000e+00 : f32
      %53 = vector.broadcast %cst_29 : f32 to vector<8x32xf32>
      %54 = arith.addf %53, %52 : vector<8x32xf32>
      %55 = arith.mulf %17, %54 : vector<8x32xf32>
      %cst_30 = arith.constant dense<0.000000e+00> : vector<8xf32>
      %56 = vector.multi_reduction <add>, %55, %cst_30 [1] : vector<8x32xf32> to vector<8xf32>
      %57 = vector.shape_cast %56 : vector<8xf32> to vector<8x1xf32>
      %58 = arith.mulf %55, %55 : vector<8x32xf32>
      %cst_31 = arith.constant dense<0.000000e+00> : vector<8xf32>
      %59 = vector.multi_reduction <add>, %58, %cst_31 [1] : vector<8x32xf32> to vector<8xf32>
      %60 = vector.shape_cast %59 : vector<8xf32> to vector<8x1xf32>
      %cst_32 = arith.constant 3.125000e-02 : f32
      %61 = vector.broadcast %cst_32 : f32 to vector<8x1xf32>
      %62 = arith.mulf %57, %61 : vector<8x1xf32>
      %cst_33 = arith.constant 3.125000e-02 : f32
      %63 = vector.broadcast %cst_33 : f32 to vector<8x1xf32>
      %64 = arith.mulf %60, %63 : vector<8x1xf32>
      %65 = arith.mulf %62, %62 : vector<8x1xf32>
      %66 = arith.subf %64, %65 : vector<8x1xf32>
      %cst_34 = arith.constant 0.000000e+00 : f32
      %67 = vector.broadcast %cst_34 : f32 to vector<8x1xf32>
      %68 = arith.maximumf %66, %67 : vector<8x1xf32>
      %c0_35 = arith.constant 0 : index
      %c0_36 = arith.constant 0 : index
      %69 = vector.load %arg5[%c0_35, %c0_36] : memref<1x32xf32, #tpu.memory_space<vmem>>, vector<1x32xf32>
      %70 = vector.broadcast %62 : vector<8x1xf32> to vector<8x32xf32>
      %71 = arith.subf %55, %70 : vector<8x32xf32>
      %cst_37 = arith.constant 9.99999974E-6 : f32
      %72 = vector.broadcast %cst_37 : f32 to vector<8x1xf32>
      %73 = arith.addf %68, %72 : vector<8x1xf32>
      %74 = math.rsqrt %73 : vector<8x1xf32>
      %75 = vector.broadcast %74 : vector<8x1xf32> to vector<8x32xf32>
      %76 = arith.mulf %71, %75 : vector<8x32xf32>
      %77 = vector.broadcast %69 : vector<1x32xf32> to vector<8x32xf32>
      %78 = arith.mulf %77, %76 : vector<8x32xf32>
      %c0_38 = arith.constant 0 : index
      %c0_39 = arith.constant 0 : index
      %79 = vector.load %arg6[%c0_38, %c0_39] : memref<1x32xf32, #tpu.memory_space<vmem>>, vector<1x32xf32>
      %80 = vector.broadcast %79 : vector<1x32xf32> to vector<8x32xf32>
      %81 = arith.addf %78, %80 : vector<8x32xf32>
      %82 = arith.truncf %81 : vector<8x32xf32> to vector<8x32xbf16>
      %c0_40 = arith.constant 0 : index
      %c0_41 = arith.constant 0 : index
      %83 = vector.load %arg10[%c0_40, %c0_41] : memref<8x32xbf16, #tpu.memory_space<vmem>>, vector<8x32xbf16>
      tpu.vector_store %arg10[%c0_40, %c0_41], %82 {strides = array<i32>} : memref<8x32xbf16, #tpu.memory_space<vmem>>, vector<8x32xbf16>,
    } else {
    }
    %c0 = arith.constant 0 : index
    %c0_1 = arith.constant 0 : index
    %3 = vector.load %arg10[%c0, %c0_1] : memref<8x32xbf16, #tpu.memory_space<vmem>>, vector<8x32xbf16>
    %c0_2 = arith.constant 0 : index
    %c0_3 = arith.constant 0 : index
    %4 = vector.load %arg7[%c0_2, %c0_3] : memref<32x128xbf16, #tpu.memory_space<vmem>>, vector<32x128xbf16>
    %cst = arith.constant dense<0.000000e+00> : vector<8x128xf32>
    %5 = tpu.matmul %3, %4, %cst {dimension_numbers = #tpu.dot_dimension_numbers<[1], [0], [0], [1], [0, 0, 1, 1], [], []>} : vector<8x32xbf16>, vector<32x128xbf16>, vector<8x128xf32> -> vector<8x128xf32>
    %c0_4 = arith.constant 0 : index
    %c0_5 = arith.constant 0 : index
    %6 = vector.load %arg8[%c0_4, %c0_5] : memref<1x128xf32, #tpu.memory_space<vmem>>, vector<1x128xf32>
    %7 = vector.broadcast %6 : vector<1x128xf32> to vector<8x128xf32>
    %8 = arith.addf %5, %7 : vector<8x128xf32>
    %c0_6 = arith.constant 0 : index
    %c0_7 = arith.constant 0 : index
    %9 = vector.load %arg9[%c0_6, %c0_7] : memref<8x128xf32, #tpu.memory_space<vmem>>, vector<8x128xf32>
    tpu.vector_store %arg9[%c0_6, %c0_7], %8 {strides = array<i32>} : memref<8x128xf32, #tpu.memory_space<vmem>>, vector<8x128xf32>,
    return
  }
  func.func @transform_0(%arg0: i32, %arg1: i32) -> (i32, i32) {
    %c0_i32 = arith.constant 0 : i32
    %c0_i32_0 = arith.constant 0 : i32
    return %arg0, %c0_i32 : i32, i32
  }
  func.func @transform_1(%arg0: i32, %arg1: i32) -> (i32, i32) {
    %c0_i32 = arith.constant 0 : i32
    %c0_i32_0 = arith.constant 0 : i32
    %c0_i32_1 = arith.constant 0 : i32
    return %c0_i32, %c0_i32_0 : i32, i32
  }
  func.func @transform_2(%arg0: i32, %arg1: i32) -> (i32, i32) {
    %c0_i32 = arith.constant 0 : i32
    %c0_i32_0 = arith.constant 0 : i32
    %c0_i32_1 = arith.constant 0 : i32
    return %c0_i32, %c0_i32_0 : i32, i32
  }
  func.func @transform_3(%arg0: i32, %arg1: i32) -> (i32, i32) {
    %c0_i32 = arith.constant 0 : i32
    %c0_i32_0 = arith.constant 0 : i32
    %c0_i32_1 = arith.constant 0 : i32
    return %c0_i32, %c0_i32_0 : i32, i32
  }
  func.func @transform_4(%arg0: i32, %arg1: i32) -> (i32, i32) {
    %c0_i32 = arith.constant 0 : i32
    %c0_i32_0 = arith.constant 0 : i32
    %c0_i32_1 = arith.constant 0 : i32
    return %c0_i32, %c0_i32_0 : i32, i32
  }
  func.func @transform_5(%arg0: i32, %arg1: i32) -> (i32, i32) {
    %c0_i32 = arith.constant 0 : i32
    %c0_i32_0 = arith.constant 0 : i32
    return %c0_i32, %arg1 : i32, i32
  }
  func.func @transform_6(%arg0: i32, %arg1: i32) -> (i32, i32) {
    %c0_i32 = arith.constant 0 : i32
    %c0_i32_0 = arith.constant 0 : i32
    return %c0_i32, %arg1 : i32, i32
  }
  func.func @transform_7(%arg0: i32, %arg1: i32) -> (i32, i32) {
    %c0_i32 = arith.constant 0 : i32
    return %arg0, %arg1 : i32, i32
  }
}

</mosaic_0001>

<llo_original>
// kernel: tpu_custom_call.1
$region0: #{tpu_custom_call.1}
  #allocation0 [shape = 'u32[]', space=smem, size = 0x4, offset = 0x4, fixed_abs, tag = 'smem constant byte address 0x4 - core index']
  #allocation1 [shape = 'u32[144,128]{1,0:T(1,128)}', space=vmem, size = 0x12000, scoped, tag = 'internal scratch']
  #allocation2 [shape = 'bf16[8,32]{1,0:T(8,128)(2,1)}', space=vmem, size = 0x800, scoped, tag = 'scratch operand']
  %s0 = inlined_call_operand.hbm [shape: bf16[16,32], index: 0, kind: input, shape index: {}]
  %s1 = inlined_call_operand.hbm [shape: bf16[32,32], index: 1, kind: input, shape index: {}]
  %s2 = inlined_call_operand.vmem [shape: f32[1,32], index: 2, kind: input, shape index: {}]
  %s3 = inlined_call_operand.vmem [shape: f32[1,32], index: 3, kind: input, shape index: {}]
  %s4 = inlined_call_operand.vmem [shape: f32[1,32], index: 4, kind: input, shape index: {}]
  %s5 = inlined_call_operand.hbm [shape: bf16[32,256], index: 5, kind: input, shape index: {}]
  %s6 = inlined_call_operand.vmem [shape: f32[1,256], index: 6, kind: input, shape index: {}]
  %s7 = inlined_call_operand.hbm [shape: f32[16,256], index: 7, kind: output, shape index: {}]
  %s8 = sld [smem:[#allocation0]]
  $region77: #{tpu_custom_call.1} parent=0
    _
  %s10 = ssub.s32 1, %s8
  %s11 = scalar_select 0, %s10, %s8
  $region1: #{tpu_custom_call.1} parent=0
    #allocation3 [shape = 'u8[4096]{0}', space=vmem, size = 0x1000, scoped, tag = 'input window, operand 0']
    #allocation4 [shape = 's32[2]{0}', space=sflag, size = 0x8, scoped, tag = 'scoped memory for tpu_custom_call.1']
    #allocation5 [shape = 's32[2]{0}', space=sflag, size = 0x8, scoped, tag = 'scoped memory for tpu_custom_call.1']
    #allocation6 [shape = 'u8[8192]{0}', space=vmem, size = 0x2000, scoped, tag = 'input window, operand 1, single buffered']
    #allocation7 [shape = 's32[1]{0}', space=sflag, size = 0x4, scoped, tag = 'scoped memory for tpu_custom_call.1']
    #allocation8 [shape = 'u8[16384]{0}', space=vmem, size = 0x4000, scoped, tag = 'input window, operand 5']
    #allocation9 [shape = 'u8[8192]{0}', space=vmem, size = 0x2000, scoped, tag = 'output window, operand 0']
    %12 = vsyncpa [#allocation4], 0
    %s13 = scalar_lea.sflag [#allocation4], 1
    %14 = vsyncpa %s13, 0
    %15 = vsyncpa [#allocation7], 0
    %16 = vsyncpa [#allocation5], 0
    %s17 = scalar_lea.sflag [#allocation5], 1
    %18 = vsyncpa %s17, 0
    loop: start=0, step=1, limit=6
    $region2: #{tpu_custom_call.1} parent=1 // loop_pre_header
      _
    $region3: #{tpu_custom_call.1} parent=1 // loop_header
      %s20 = sphi 0, %s24
      %p21 = scmp.ge.s32.totalorder %s20, 6
      %s27 = sphi 0, %s39
      %s28 = sphi 0, %s35
      %s29 = sphi 0, %s27
      %s30 = sphi 0, %s28
      %s31 = sphi 0, %s29
      %s32 = sphi 0, %s30
      %s42 = sphi 0, %s44
      %s45 = sphi 0, %s42
      %s46 = sphi 0, %s45
      %s62 = sphi 0, %s46
      %s66 = sphi 0, %s66
      %s68 = sphi 0, %s66
      %s69 = sphi 0, %s68
      %s83 = sphi 0, %s69
      %s87 = sphi 0, %s87
      %s89 = sphi 0, %s87
      %s90 = sphi 0, %s89
      %s104 = sphi 0, %s90
      %s108 = sphi 0, %s108
      %s110 = sphi 0, %s108
      %s111 = sphi 0, %s110
      %s125 = sphi 0, %s111
      %s129 = sphi 0, %s129
      %s131 = sphi 0, %s129
      %s132 = sphi 0, %s131
      %s146 = sphi 0, %s132
      %s152 = sphi 0, %s154
      %s155 = sphi 0, %s152
      %s156 = sphi 0, %s155
      %s172 = sphi 0, %s156
      %s178 = sphi 0, %s180
      %s181 = sphi 0, %s178
      %s182 = sphi 0, %s181
      %s198 = sphi 0, %s182
      %s206 = sphi 0, %s208
      %s209 = sphi 0, %s206
      %s210 = sphi 0, %s209
      %s226 = sphi 0, %s210
    $region4: #{tpu_custom_call.1} parent=1 // loop_header_branch
      %23 = sbr.rel (%p21) target = $region8
    $region5: #{tpu_custom_call.1} parent=1 // loop_body
      %s25 = ssub.s32 %s20, 1
      %s26 = ssub.s32 %s20, 2
      %s33 = sadd.s32 1, %s28
      %p34 = scmp.ge.s32.totalorder %s33, 2
      %s35 = scalar_select %p34, 0, %s33
      %s36 = sadd.s32 1, %s27
      %s37 = scalar_select %p34, %s36, %s27
      %p38 = scmp.ge.s32.totalorder %s37, 2
      %s39 = scalar_select %p38, 0, %s37
      %s40 = ssub.s32 %s27, %s39
      %p41 = scmp.eq.s32.totalorder %s40, 0
      %s43 = sadd.s32 %s42, 1
      %s44 = scalar_select %p41, %s42, %s43
      %p47 = pneg %p41
      %p48 = scmp.eq.s32.totalorder %s20, 3
      %p49 = por %p47, %p48
      %p50 = scmp.ne.s32.totalorder %s42, %s45
      %p51 = scmp.eq.s32.totalorder %s20, 0
      %p52 = por %p50, %p51
      %p53 = scmp.ne.s32.totalorder %s42, %s45
      %p54 = scmp.eq.s32.totalorder %s25, 3
      %p55 = por %p53, %p54
      %p56 = scmp.ne.s32.totalorder %s45, %s46
      %p57 = scmp.eq.s32.totalorder %s25, 0
      %p58 = por %p56, %p57
      %p59 = scmp.ne.s32.totalorder %s45, %s46
      %p60 = scmp.eq.s32.totalorder %s26, 3
      %p61 = por %p59, %p60
      %p63 = scmp.ne.s32.totalorder %s46, %s62
      %p64 = scmp.eq.s32.totalorder %s26, 0
      %p65 = por %p63, %p64
      %s67 = sadd.s32 %s66, 1
      %p70 = scmp.eq.s32.totalorder %s20, 3
      %p71 = scmp.ne.s32.totalorder %s66, %s68
      %p72 = scmp.eq.s32.totalorder %s20, 0
      %p73 = por %p71, %p72
      %p74 = scmp.ne.s32.totalorder %s66, %s68
      %p75 = scmp.eq.s32.totalorder %s25, 3
      %p76 = por %p74, %p75
      %p77 = scmp.ne.s32.totalorder %s68, %s69
      %p78 = scmp.eq.s32.totalorder %s25, 0
      %p79 = por %p77, %p78
      %p80 = scmp.ne.s32.totalorder %s68, %s69
      %p81 = scmp.eq.s32.totalorder %s26, 3
      %p82 = por %p80, %p81
      %p84 = scmp.ne.s32.totalorder %s69, %s83
      %p85 = scmp.eq.s32.totalorder %s26, 0
      %p86 = por %p84, %p85
      %s88 = sadd.s32 %s87, 1
      %p91 = scmp.eq.s32.totalorder %s20, 3
      %p92 = scmp.ne.s32.totalorder %s87, %s89
      %p93 = scmp.eq.s32.totalorder %s20, 0
      %p94 = por %p92, %p93
      %p95 = scmp.ne.s32.totalorder %s87, %s89
      %p96 = scmp.eq.s32.totalorder %s25, 3
      %p97 = por %p95, %p96
      %p98 = scmp.ne.s32.totalorder %s89, %s90
      %p99 = scmp.eq.s32.totalorder %s25, 0
      %p100 = por %p98, %p99
      %p101 = scmp.ne.s32.totalorder %s89, %s90
      %p102 = scmp.eq.s32.totalorder %s26, 3
      %p103 = por %p101, %p102
      %p105 = scmp.ne.s32.totalorder %s90, %s104
      %p106 = scmp.eq.s32.totalorder %s26, 0
      %p107 = por %p105, %p106
      %s109 = sadd.s32 %s108, 1
      %p112 = scmp.eq.s32.totalorder %s20, 3
      %p113 = scmp.ne.s32.totalorder %s108, %s110
      %p114 = scmp.eq.s32.totalorder %s20, 0
      %p115 = por %p113, %p114
      %p116 = scmp.ne.s32.totalorder %s108, %s110
      %p117 = scmp.eq.s32.totalorder %s25, 3
      %p118 = por %p116, %p117
      %p119 = scmp.ne.s32.totalorder %s110, %s111
      %p120 = scmp.eq.s32.totalorder %s25, 0
      %p121 = por %p119, %p120
      %p122 = scmp.ne.s32.totalorder %s110, %s111
      %p123 = scmp.eq.s32.totalorder %s26, 3
      %p124 = por %p122, %p123
      %p126 = scmp.ne.s32.totalorder %s111, %s125
      %p127 = scmp.eq.s32.totalorder %s26, 0
      %p128 = por %p126, %p127
      %s130 = sadd.s32 %s129, 1
      %p133 = scmp.eq.s32.totalorder %s20, 3
      %p134 = scmp.ne.s32.totalorder %s129, %s131
      %p135 = scmp.eq.s32.totalorder %s20, 0
      %p136 = por %p134, %p135
      %p137 = scmp.ne.s32.totalorder %s129, %s131
      %p138 = scmp.eq.s32.totalorder %s25, 3
      %p139 = por %p137, %p138
      %p140 = scmp.ne.s32.totalorder %s131, %s132
      %p141 = scmp.eq.s32.totalorder %s25, 0
      %p142 = por %p140, %p141
      %p143 = scmp.ne.s32.totalorder %s131, %s132
      %p144 = scmp.eq.s32.totalorder %s26, 3
      %p145 = por %p143, %p144
      %p147 = scmp.ne.s32.totalorder %s132, %s146
      %p148 = scmp.eq.s32.totalorder %s26, 0
      %p149 = por %p147, %p148
      %s150 = ssub.s32 %s28, %s35
      %p151 = scmp.eq.s32.totalorder %s150, 0
      %s153 = sadd.s32 %s152, 1
      %s154 = scalar_select %p151, %s152, %s153
      %p157 = pneg %p151
      %p158 = scmp.eq.s32.totalorder %s20, 3
      %p159 = por %p157, %p158
      %p160 = scmp.ne.s32.totalorder %s152, %s155
      %p161 = scmp.eq.s32.totalorder %s20, 0
      %p162 = por %p160, %p161
      %p163 = scmp.ne.s32.totalorder %s152, %s155
      %p164 = scmp.eq.s32.totalorder %s25, 3
      %p165 = por %p163, %p164
      %p166 = scmp.ne.s32.totalorder %s155, %s156
      %p167 = scmp.eq.s32.totalorder %s25, 0
      %p168 = por %p166, %p167
      %p169 = scmp.ne.s32.totalorder %s155, %s156
      %p170 = scmp.eq.s32.totalorder %s26, 3
      %p171 = por %p169, %p170
      %p173 = scmp.ne.s32.totalorder %s156, %s172
      %p174 = scmp.eq.s32.totalorder %s26, 0
      %p175 = por %p173, %p174
      %s176 = ssub.s32 %s28, %s35
      %p177 = scmp.eq.s32.totalorder %s176, 0
      %s179 = sadd.s32 %s178, 1
      %s180 = scalar_select %p177, %s178, %s179
      %p183 = pneg %p177
      %p184 = scmp.eq.s32.totalorder %s20, 3
      %p185 = por %p183, %p184
      %p186 = scmp.ne.s32.totalorder %s178, %s181
      %p187 = scmp.eq.s32.totalorder %s20, 0
      %p188 = por %p186, %p187
      %p189 = scmp.ne.s32.totalorder %s178, %s181
      %p190 = scmp.eq.s32.totalorder %s25, 3
      %p191 = por %p189, %p190
      %p192 = scmp.ne.s32.totalorder %s181, %s182
      %p193 = scmp.eq.s32.totalorder %s25, 0
      %p194 = por %p192, %p193
      %p195 = scmp.ne.s32.totalorder %s181, %s182
      %p196 = scmp.eq.s32.totalorder %s26, 3
      %p197 = por %p195, %p196
      %p199 = scmp.ne.s32.totalorder %s182, %s198
      %p200 = scmp.eq.s32.totalorder %s26, 0
      %p201 = por %p199, %p200
      %s202 = ssub.s32 %s27, %s39
      %s203 = ssub.s32 %s28, %s35
      %s204 = sor.u32 %s202, %s203
      %p205 = scmp.eq.s32.totalorder %s204, 0
      %s207 = sadd.s32 %s206, 1
      %s208 = scalar_select %p205, %s206, %s207
      %p211 = pneg %p205
      %p212 = scmp.eq.s32.totalorder %s20, 3
      %p213 = por %p211, %p212
      %p214 = scmp.ne.s32.totalorder %s206, %s209
      %p215 = scmp.eq.s32.totalorder %s20, 0
      %p216 = por %p214, %p215
      %p217 = scmp.ne.s32.totalorder %s206, %s209
      %p218 = scmp.eq.s32.totalorder %s25, 3
      %p219 = por %p217, %p218
      %p220 = scmp.ne.s32.totalorder %s209, %s210
      %p221 = scmp.eq.s32.totalorder %s25, 0
      %p222 = por %p220, %p221
      %p223 = scmp.ne.s32.totalorder %s209, %s210
      %p224 = scmp.eq.s32.totalorder %s26, 3
      %p225 = por %p223, %p224
      %p227 = scmp.ne.s32.totalorder %s210, %s226
      %p228 = scmp.eq.s32.totalorder %s26, 0
      %p229 = por %p227, %p228
      %p230 = scmp.le.s32.totalorder 1, %s20
      %p231 = scmp.lt.s32.totalorder %s20, 5
      %p232 = pnand %p230, %p231
      %p233 = pneg %p232
      // Predicated region
      $region9: #{tpu_custom_call.1} parent=5 // pred_check
        _
      $region10: #{tpu_custom_call.1} parent=5 // pred_check_branch
        %235 = sbr.rel (%p232) target = $region12
      $region11: #{tpu_custom_call.1} parent=5 // pred_region
        %s236 = ssub.s32 %s20, 1
        // Predicated region
        $region13: #{tpu_custom_call.1} parent=11 // pred_check
          %p237 = pneg %p79
        $region14: #{tpu_custom_call.1} parent=11 // pred_check_branch
          %239 = sbr.rel (%p237) target = $region16
        $region15: #{tpu_custom_call.1} parent=11 // pred_region
          %s241 = ssub.s32 256, 256
          %242 = vsyncadd [#allocation7], %s241
          %s243 = sshll.u32 [#allocation6], 4
          %s244 = int_to_ptr.vmem [resolvable:$true] %s243
          %249 = dma.hbm_to_vmem [thread:$0]  %s1, 256, %s244, [#allocation7], 64, 64, 4
        $region16: #{tpu_custom_call.1} parent=11 // pred_fallthru
          _
        // Predicated region
        $region17: #{tpu_custom_call.1} parent=11 // pred_check
          %p250 = pneg %p100
        $region18: #{tpu_custom_call.1} parent=11 // pred_check_branch
          %252 = sbr.rel (%p250) target = $region20
        $region19: #{tpu_custom_call.1} parent=11 // pred_region
          _
        $region20: #{tpu_custom_call.1} parent=11 // pred_fallthru
          _
        // Predicated region
        $region21: #{tpu_custom_call.1} parent=11 // pred_check
          %p253 = pneg %p121
        $region22: #{tpu_custom_call.1} parent=11 // pred_check_branch
          %255 = sbr.rel (%p253) target = $region24
        $region23: #{tpu_custom_call.1} parent=11 // pred_region
          _
        $region24: #{tpu_custom_call.1} parent=11 // pred_fallthru
          _
        // Predicated region
        $region25: #{tpu_custom_call.1} parent=11 // pred_check
          %p256 = pneg %p142
        $region26: #{tpu_custom_call.1} parent=11 // pred_check_branch
          %258 = sbr.rel (%p256) target = $region28
        $region27: #{tpu_custom_call.1} parent=11 // pred_region
          _
        $region28: #{tpu_custom_call.1} parent=11 // pred_fallthru
          _
      $region12: #{tpu_custom_call.1} parent=5 // pred_fallthru
        _
      %p259 = scmp.lt.s32.totalorder %s20, 4
      // Predicated region
      $region29: #{tpu_custom_call.1} parent=5 // pred_check
        %p260 = pneg %p259
      $region30: #{tpu_custom_call.1} parent=5 // pred_check_branch
        %262 = sbr.rel (%p260) target = $region32
      $region31: #{tpu_custom_call.1} parent=5 // pred_region
        // Predicated region
        $region33: #{tpu_custom_call.1} parent=31 // pred_check
          %p263 = pneg %p52
        $region34: #{tpu_custom_call.1} parent=31 // pred_check_branch
          %265 = sbr.rel (%p263) target = $region36
        $region35: #{tpu_custom_call.1} parent=31 // pred_region
          %s266 = sand.u32 %s20, 1
          %s267 = scalar_lea.sflag [#allocation4], %s266
          %s268 = sand.u32 %s42, 1
          %s269 = smul.addr %s268, 4
          %s270 = scalar_lea.vmem [#allocation3], %s269
          %s272 = ssub.s32 64, 64
          %273 = vsyncadd %s267, %s272
          %s274 = smul.addr %s27, 64
          %s275 = scalar_lea.hbm %s0, %s274
          %s277 = sshll.u32 %s270, 4
          %s278 = int_to_ptr.vmem [resolvable:$true] %s277
          %280 = dma.hbm_to_vmem [thread:$0]  %s275, 64, %s278, %s267
        $region36: #{tpu_custom_call.1} parent=31 // pred_fallthru
          _
        // Predicated region
        $region37: #{tpu_custom_call.1} parent=31 // pred_check
          %p281 = pneg %p162
        $region38: #{tpu_custom_call.1} parent=31 // pred_check_branch
          %283 = sbr.rel (%p281) target = $region40
        $region39: #{tpu_custom_call.1} parent=31 // pred_region
          %s284 = sand.u32 %s20, 1
          %s285 = scalar_lea.sflag [#allocation4], %s284
          %s286 = sand.u32 %s152, 1
          %s287 = smul.addr %s286, 16
          %s288 = scalar_lea.vmem [#allocation8], %s287
          %s290 = ssub.s32 256, 256
          %291 = vsyncadd %s285, %s290
          %s292 = smul.addr %s28, 64
          %s293 = scalar_lea.hbm %s5, %s292
          %s294 = sshll.u32 %s288, 4
          %s295 = int_to_ptr.vmem [resolvable:$true] %s294
          %300 = dma.hbm_to_vmem [thread:$0]  %s293, 256, %s295, %s285, 128, 64, 4
        $region40: #{tpu_custom_call.1} parent=31 // pred_fallthru
          _
        // Predicated region
        $region41: #{tpu_custom_call.1} parent=31 // pred_check
          %p301 = pneg %p188
        $region42: #{tpu_custom_call.1} parent=31 // pred_check_branch
          %303 = sbr.rel (%p301) target = $region44
        $region43: #{tpu_custom_call.1} parent=31 // pred_region
          %p304 = scmp.lt.s32.totalorder %s28, 1
          %s305 = scalar_select %p304, %s28, 1
          %s306 = scalar_lea.vmem %s6, %s305
        $region44: #{tpu_custom_call.1} parent=31 // pred_fallthru
          _
      $region32: #{tpu_custom_call.1} parent=5 // pred_fallthru
        _
      %p307 = scmp.le.s32.totalorder 1, %s20
      %p308 = scmp.lt.s32.totalorder %s20, 5
      %p309 = pnand %p307, %p308
      %p310 = pneg %p309
      // Predicated region
      $region45: #{tpu_custom_call.1} parent=5 // pred_check
        _
      $region46: #{tpu_custom_call.1} parent=5 // pred_check_branch
        %312 = sbr.rel (%p309) target = $region48
      $region47: #{tpu_custom_call.1} parent=5 // pred_region
        %s313 = ssub.s32 %s20, 1
        %s314 = sand.u32 %s25, 1
        %s315 = scalar_lea.sflag [#allocation4], %s314
        %s316 = sand.u32 %s45, 1
        %s317 = smul.addr %s316, 4
        %s318 = scalar_lea.vmem [#allocation3], %s317
        // Predicated region
        $region49: #{tpu_custom_call.1} parent=47 // pred_check
          %p319 = pneg %p58
        $region50: #{tpu_custom_call.1} parent=47 // pred_check_branch
          %321 = sbr.rel (%p319) target = $region52
        $region51: #{tpu_custom_call.1} parent=47 // pred_region
          %322 = dma.done %s315, 64
        $region52: #{tpu_custom_call.1} parent=47 // pred_fallthru
          _
        // Predicated region
        $region53: #{tpu_custom_call.1} parent=47 // pred_check
          %p323 = pneg %p79
        $region54: #{tpu_custom_call.1} parent=47 // pred_check_branch
          %325 = sbr.rel (%p323) target = $region56
        $region55: #{tpu_custom_call.1} parent=47 // pred_region
          %326 = dma.done [#allocation7], 256
        $region56: #{tpu_custom_call.1} parent=47 // pred_fallthru
          _
        %s327 = sand.u32 %s25, 1
        %s328 = scalar_lea.sflag [#allocation4], %s327
        %s329 = sand.u32 %s155, 1
        %s330 = smul.addr %s329, 16
        %s331 = scalar_lea.vmem [#allocation8], %s330
        // Predicated region
        $region57: #{tpu_custom_call.1} parent=47 // pred_check
          %p332 = pneg %p168
        $region58: #{tpu_custom_call.1} parent=47 // pred_check_branch
          %334 = sbr.rel (%p332) target = $region60
        $region59: #{tpu_custom_call.1} parent=47 // pred_region
          %335 = dma.done %s328, 256
        $region60: #{tpu_custom_call.1} parent=47 // pred_fallthru
          _
        %s336 = sand.u32 %s25, 1
        %s337 = scalar_lea.sflag [#allocation4], %s336
        %s338 = sand.u32 %s45, 1
        %s339 = smul.addr %s338, 4
        %s340 = scalar_lea.vmem [#allocation3], %s339
        %p341 = pneg %p58
        %p342 = pneg %p55
        %p343 = pneg %p79
        %p344 = pneg %p76
        %p345 = pneg %p100
        %p346 = pneg %p97
        %p347 = pneg %p121
        %p348 = pneg %p118
        %p349 = pneg %p142
        %p350 = pneg %p139
        %s351 = sand.u32 %s25, 1
        %s352 = scalar_lea.sflag [#allocation4], %s351
        %s353 = sand.u32 %s155, 1
        %s354 = smul.addr %s353, 16
        %s355 = scalar_lea.vmem [#allocation8], %s354
        %p356 = pneg %p168
        %p357 = pneg %p165
        %p358 = scmp.lt.s32.totalorder %s30, 1
        %s359 = scalar_select %p358, %s30, 1
        %s360 = scalar_lea.vmem %s6, %s359
        %p361 = pneg %p194
        %p362 = pneg %p191
        %p363 = pneg %p222
        %p364 = pneg %p219
        %s365 = sand.u32 %s209, 1
        %s366 = scalar_lea.sflag [#allocation5], %s365
        %s367 = sand.u32 %s209, 1
        %s368 = smul.addr %s367, 8
        %s369 = scalar_lea.vmem [#allocation9], %s368
        %p370 = scmp.lt.s32.totalorder %s30, 1
        %s371 = scalar_select %p370, %s30, 1
        %s372 = scalar_lea.vmem %s6, %s371
        %p374 = scmp.eq.s32.totalorder %s30, 0
        // Predicated region
        $region61: #{tpu_custom_call.1} parent=47 // pred_check
          %p375 = pneg %p374
        $region62: #{tpu_custom_call.1} parent=47 // pred_check_branch
          %377 = sbr.rel (%p375) target = $region64
        $region63: #{tpu_custom_call.1} parent=47 // pred_region
          %v378 = vld [vmem:[%s318] sm:$0xf]
          %v379 = vld [vmem:[#allocation6] sm:$0xf]
          %v380 = vld [vmem:[#allocation6 + $0x4] sm:$0xf]
          %v381 = vld [vmem:[#allocation6 + $0x8] sm:$0xf]
          %v382 = vld [vmem:[#allocation6 + $0xc] sm:$0xf]
          %v383 = vld [vmem:[%s2] sm:$0x1]
          %v385 = vlaneseq
          %v386 = vshrl.u32 %v385, 7
          %v387 = vsub.s32 0, %v386
          %v388 = vrot.slane %v383, %v387
          %v394 = vunpack.c.l.b16 %v379
          %v395 = vunpack.c.l.b16 %v380
          %v396 = vunpack.c.l.b16 %v381
          %v397 = vunpack.c.l.b16 %v382
          %v398 = vpack.c.b16 %v395, %v394
          %v399 = vpack.c.b16 %v397, %v396
          %vm402 = vcmask 261120
          %v404 = vsel %vm402, %v378, 0
          %406 = vmatprep.subr.bf16.mxu0 0
          %407 = vmatpush1.bf16.msra.mxu0 %v398
          %408 = vmatprep.subr.bf16.mxu0 0
          %409 = vmatpush1.bf16.msra.mxu0 %v399
          %410 = vmatprep.subr.bf16.mxu0 0
          %411 = vmatpush1.bf16.msra.mxu0 0
          %412 = vmatprep.subr.bf16.mxu0 0
          %413 = vmatpush1.bf16.msra.mxu0 0
          %414 = vmatprep.subr.bf16.mxu0 0
          %415 = vmatpush1.bf16.msra.mxu0 0
          %416 = vmatprep.subr.bf16.mxu0 0
          %417 = vmatpush1.bf16.msra.mxu0 0
          %418 = vmatprep.subr.bf16.mxu0 0
          %419 = vmatpush1.bf16.msra.mxu0 0
          %420 = vmatprep.subr.bf16.mxu0 0
          %421 = vmatpush1.bf16.msra.mxu0 0
          %422 = vmatprep.subr.bf16.mxu0 0
          %423 = vmatpush1.bf16.msra.mxu0 0
          %424 = vmatprep.subr.bf16.mxu0 0
          %425 = vmatpush1.bf16.msra.mxu0 0
          %426 = vmatprep.subr.bf16.mxu0 0
          %427 = vmatpush1.bf16.msra.mxu0 0
          %428 = vmatprep.subr.bf16.mxu0 0
          %429 = vmatpush1.bf16.msra.mxu0 0
          %430 = vmatprep.subr.bf16.mxu0 0
          %431 = vmatpush1.bf16.msra.mxu0 0
          %432 = vmatprep.subr.bf16.mxu0 0
          %433 = vmatpush1.bf16.msra.mxu0 0
          %434 = vmatprep.subr.bf16.mxu0 0
          %435 = vmatpush1.bf16.msra.mxu0 0
          %436 = vmatprep.subr.bf16.mxu0 0
          %437 = vmatpush1.bf16.msra.mxu0 0
          %438 = vmatprep.mubr.bf16.mxu0 0
          %439 = vmatmul.mubr.bf16.gmra.mrb[0].mxu0 %v404
          %v440 = vpop.f32.mrb[0].mxu0
          %v441 = vadd.f32 %v388, %v440
          %v442 = vpop.f32.mrb[0].mxu0
          %v443 = vpop.f32.mrb[0].mxu0
          %v444 = vpop.f32.mrb[0].mxu0
          %445 = vdwg.mxu0
          %v446 = vmul.f32 %v441, 0.5
          %v447 = vmul.f32 %v441, 0.70710677
          %v448 = vand.u32 2147483647, %v447
          %v449 = vmul.f32 %v448, 0.3275911
          %v450 = vadd.f32 %v449, 1.0
          %v451 = vrcp.pop %v450
          %v452 = vmul.f32 1.0, %v451
          %v453 = vmul.f32 %v452, 1.0614054
          %v454 = vadd.f32 %v453, -1.4531521
          %v455 = vmul.f32 %v454, %v452
          %v456 = vadd.f32 %v455, 1.4214138
          %v457 = vmul.f32 %v456, %v452
          %v458 = vadd.f32 %v457, -0.28449672
          %v459 = vmul.f32 %v458, %v452
          %v460 = vadd.f32 %v459, 0.2548296
          %v461 = vmul.f32 %v460, %v452
          %v462 = vsub.f32 0.0, %v448
          %v463 = vmul.f32 %v462, %v448
          %v464 = vmul.f32 %v463, 1.442695
          %v465 = vpow.pop %v464
          %v466 = vmul.f32 %v461, %v465
          %v467 = vsub.f32 1.0, %v466
          %vm468 = vcmp.ge.f32.partialorder %v447, 0.0
          %v469 = vsub.f32 0.0, %v467
          %v470 = vsel %vm468, %v467, %v469
          %v471 = vadd.f32 %v470, 1.0
          %v472 = vmul.f32 %v446, %v471
          %v473 = vsel %vm402, %v472, 0.0
          %474 = vadd.xlane.f32.xlu0 %v473
          %v475 = vpop.xlane.xlu0 %474
          %v476 = vmul.f32 %v472, %v472
          %v477 = vsel %vm402, %v476, 0.0
          %478 = vadd.xlane.f32.xlu0 %v477
          %v479 = vpop.xlane.xlu0 %478
          %v480 = vmul.f32 %v475, 0.03125
          %v481 = vmul.f32 %v479, 0.03125
          %v482 = vmul.f32 %v480, %v480
          %v483 = vsub.f32 %v481, %v482
          %v484 = vmax.f32 %v483, 0.0
          %v485 = vld [vmem:[%s3] sm:$0x1]
          %v486 = vsub.f32 %v472, %v480
          %v487 = vadd.f32 %v484, 1e-05
          %v488 = vrsqrt.pop %v487
          %v489 = vmul.f32 %v486, %v488
          %v491 = vlaneseq
          %v492 = vshrl.u32 %v491, 7
          %v493 = vsub.s32 0, %v492
          %v494 = vrot.slane %v485, %v493
          %v496 = vmul.f32 %v494, %v489
          %v497 = vld [vmem:[%s4] sm:$0x1]
          %v499 = vlaneseq
          %v500 = vshrl.u32 %v499, 7
          %v501 = vsub.s32 0, %v500
          %v502 = vrot.slane %v497, %v501
          %v504 = vadd.f32 %v496, %v502
          %v505 = vpack.c.bf16 %v504, %v504
          %vm506 = vcmask 257024
          %507 = vst.msk [vmem:[#allocation2] sm:$0xf] %vm506, %v505
        $region64: #{tpu_custom_call.1} parent=47 // pred_fallthru
          _
        %v508 = vld [vmem:[#allocation2] sm:$0xf]
        %v509 = vld [vmem:[%s331] sm:$0xf]
        %v510 = vld [vmem:[%s331 + $0x4] sm:$0xf]
        %v511 = vld [vmem:[%s331 + $0x8] sm:$0xf]
        %v512 = vld [vmem:[%s331 + $0xc] sm:$0xf]
        %v513 = vld [vmem:[%s372] sm:$0x1]
        %v515 = vlaneseq
        %v516 = vshrl.u32 %v515, 7
        %v517 = vsub.s32 0, %v516
        %v518 = vrot.slane %v513, %v517
        %v524 = vunpack.c.l.b16 %v509
        %v525 = vunpack.c.l.b16 %v510
        %v526 = vunpack.c.l.b16 %v511
        %v527 = vunpack.c.l.b16 %v512
        %v528 = vpack.c.b16 %v525, %v524
        %v529 = vpack.c.b16 %v527, %v526
        %vm532 = vcmask 261120
        %v534 = vsel %vm532, %v508, 0
        %536 = vmatprep.subr.bf16.mxu0 0
        %537 = vmatpush1.bf16.msra.mxu0 %v528
        %538 = vmatprep.subr.bf16.mxu0 0
        %539 = vmatpush1.bf16.msra.mxu0 %v529
        %540 = vmatprep.subr.bf16.mxu0 0
        %541 = vmatpush1.bf16.msra.mxu0 0
        %542 = vmatprep.subr.bf16.mxu0 0
        %543 = vmatpush1.bf16.msra.mxu0 0
        %544 = vmatprep.subr.bf16.mxu0 0
        %545 = vmatpush1.bf16.msra.mxu0 0
        %546 = vmatprep.subr.bf16.mxu0 0
        %547 = vmatpush1.bf16.msra.mxu0 0
        %548 = vmatprep.subr.bf16.mxu0 0
        %549 = vmatpush1.bf16.msra.mxu0 0
        %550 = vmatprep.subr.bf16.mxu0 0
        %551 = vmatpush1.bf16.msra.mxu0 0
        %552 = vmatprep.subr.bf16.mxu0 0
        %553 = vmatpush1.bf16.msra.mxu0 0
        %554 = vmatprep.subr.bf16.mxu0 0
        %555 = vmatpush1.bf16.msra.mxu0 0
        %556 = vmatprep.subr.bf16.mxu0 0
        %557 = vmatpush1.bf16.msra.mxu0 0
        %558 = vmatprep.subr.bf16.mxu0 0
        %559 = vmatpush1.bf16.msra.mxu0 0
        %560 = vmatprep.subr.bf16.mxu0 0
        %561 = vmatpush1.bf16.msra.mxu0 0
        %562 = vmatprep.subr.bf16.mxu0 0
        %563 = vmatpush1.bf16.msra.mxu0 0
        %564 = vmatprep.subr.bf16.mxu0 0
        %565 = vmatpush1.bf16.msra.mxu0 0
        %566 = vmatprep.subr.bf16.mxu0 0
        %567 = vmatpush1.bf16.msra.mxu0 0
        %568 = vmatprep.mubr.bf16.mxu0 0
        %569 = vmatmul.mubr.bf16.gmra.mrb[0].mxu0 %v534
        %v570 = vpop.f32.mrb[0].mxu0
        %v571 = vadd.f32 %v518, %v570
        %v572 = vpop.f32.mrb[0].mxu0
        %v573 = vpop.f32.mrb[0].mxu0
        %v574 = vpop.f32.mrb[0].mxu0
        %575 = vdwg.mxu0
        %576 = vst [vmem:[%s369] sm:$0xff] %v571
        %s577 = sand.u32 %s209, 1
        %s578 = scalar_lea.sflag [#allocation5], %s577
        %s579 = sand.u32 %s209, 1
        %s580 = smul.addr %s579, 8
        %s581 = scalar_lea.vmem [#allocation9], %s580
        // Predicated region
        $region65: #{tpu_custom_call.1} parent=47 // pred_check
          %p582 = pneg %p219
        $region66: #{tpu_custom_call.1} parent=47 // pred_check_branch
          %584 = sbr.rel (%p582) target = $region68
        $region67: #{tpu_custom_call.1} parent=47 // pred_region
          %s586 = ssub.s32 128, 128
          %587 = vsyncadd %s578, %s586
          %s588 = smul.addr %s29, 2
          %s589 = sadd.s32 %s30, %s588
          %s590 = smul.addr %s589, 128
          %s591 = scalar_lea.hbm %s7, %s590
          %s593 = sshll.u32 %s581, 4
          %s594 = int_to_ptr.vmem [resolvable:$true] %s593
          %596 = dma.vmem_to_hbm [thread:$0]  %s594, 128, %s591, %s578
        $region68: #{tpu_custom_call.1} parent=47 // pred_fallthru
          _
      $region48: #{tpu_custom_call.1} parent=5 // pred_fallthru
        _
      %p597 = scmp.le.s32.totalorder 2, %s20
      // Predicated region
      $region69: #{tpu_custom_call.1} parent=5 // pred_check
        %p598 = pneg %p597
      $region70: #{tpu_custom_call.1} parent=5 // pred_check_branch
        %600 = sbr.rel (%p598) target = $region72
      $region71: #{tpu_custom_call.1} parent=5 // pred_region
        %s601 = ssub.s32 %s20, 2
        // Predicated region
        $region73: #{tpu_custom_call.1} parent=71 // pred_check
          %p602 = pneg %p225
        $region74: #{tpu_custom_call.1} parent=71 // pred_check_branch
          %604 = sbr.rel (%p602) target = $region76
        $region75: #{tpu_custom_call.1} parent=71 // pred_region
          %s605 = sand.u32 %s210, 1
          %s606 = scalar_lea.sflag [#allocation5], %s605
          %s607 = sand.u32 %s210, 1
          %s608 = smul.addr %s607, 8
          %s609 = scalar_lea.vmem [#allocation9], %s608
          %610 = dma.done %s606, 128
        $region76: #{tpu_custom_call.1} parent=71 // pred_fallthru
          _
      $region72: #{tpu_custom_call.1} parent=5 // pred_fallthru
        _
    $region6: #{tpu_custom_call.1} parent=1 // loop_footer
      %s24 = sadd.s32 1, %s20
    $region7: #{tpu_custom_call.1} parent=1 // loop_footer_branch
      %19 = sbr.rel target = $region3
    $region8: #{tpu_custom_call.1} parent=1 // loop_exit
      _
    %611 = vsyncpa [#allocation4], 1
    %s612 = scalar_lea.sflag [#allocation4], 1
    %613 = vsyncpa %s612, 1
    %614 = vsyncpa [#allocation7], 1
    %615 = vsyncpa [#allocation5], 1
    %s616 = scalar_lea.sflag [#allocation5], 1
    %617 = vsyncpa %s616, 1

</llo_original>
